<compile_context>
chip_gen: v7x
topology: tpu7x:2x2x1
jax: 0.10.0
libtpu: 0.0.40
codegen_flags: <defaults>
</compile_context>

<pallas_src>
import functools

import jax
import jax.numpy as jnp
from jax.experimental import pallas as pl
from jax.experimental.pallas import tpu as pltpu


# --------------------------------------------------------------------------- #
# Kernels
# --------------------------------------------------------------------------- #
def _lse_single_block_kernel(logits_ref, out_ref, *, entropic_scale):
    """Whole class dimension in one block: plain numerically-stable LSE.

    No scratch, no init/finalize phases, no masking.
    """
    x = logits_ref[...].astype(jnp.float32)                     # (TB, C)
    if entropic_scale != 1.0:                                   # static skip
        x = x * entropic_scale
    m = jnp.max(x, axis=-1, keepdims=True)                      # (TB, 1)
    s = jnp.sum(jnp.exp(x - m), axis=-1, keepdims=True)         # (TB, 1)
    out_ref[...] = m + jnp.log(s)


def _lse_online_kernel(logits_ref, out_ref, m_sc, l_sc, *,
                       entropic_scale, num_classes, class_tile, mask_tail):
    """Online (flash-style) logsumexp over class blocks (huge vocabularies)."""
    k = pl.program_id(1)
    nk = pl.num_programs(1)

    @pl.when(k == 0)
    def _init():
        m_sc[...] = jnp.full_like(m_sc, -jnp.inf)
        l_sc[...] = jnp.zeros_like(l_sc)

    x = logits_ref[...].astype(jnp.float32)                     # (TB, TC)
    if entropic_scale != 1.0:                                   # static skip
        x = x * entropic_scale

    def _update(xv):
        m_prev = m_sc[...]
        m_new = jnp.maximum(m_prev, jnp.max(xv, axis=-1, keepdims=True))
        alpha = jnp.exp(m_prev - m_new)                         # exp(-inf)=0 at k==0
        l_sc[...] = alpha * l_sc[...] + jnp.sum(jnp.exp(xv - m_new),
                                                axis=-1, keepdims=True)
        m_sc[...] = m_new

    if mask_tail:
        # Padded class columns only exist in the very last class block; every
        # other block takes the cheap unmasked path (saves ~3-4 VALU ops/elem).
        @pl.when(k < nk - 1)
        def _full_block():
            _update(x)

        @pl.when(k == nk - 1)
        def _tail_block():
            col = jax.lax.broadcasted_iota(jnp.int32, x.shape, 1)
            valid = col < (num_classes - k * class_tile)
            _update(jnp.where(valid, x, -jnp.inf))
    else:
        # C % TC == 0: no masking anywhere (trace-time decision).
        _update(x)

    @pl.when(k == nk - 1)
    def _finalize():
        out_ref[...] = m_sc[...] + jnp.log(l_sc[...])


# --------------------------------------------------------------------------- #
# Wrapper
# --------------------------------------------------------------------------- #
def _vmem_capacity_bytes() -> int:
    """Trace-time VMEM query; conservative (v7x) fallback if unavailable."""
    try:
        return int(pltpu.get_tpu_info().vmem_capacity_bytes)
    except Exception:
        return 64 * 1024 * 1024


def softmax_loss_second_part(logits, targets, entropic_scale=1.0, *,
                             class_tile=None, batch_tile=None):
    """Cross entropy of (entropic_scale * logits) vs integer targets, mean reduced.

    `class_tile` / `batch_tile` override the tiling heuristics (used for tests).
    """
    B, C = logits.shape
    itemsize = jnp.dtype(logits.dtype).itemsize
    min_sub = 16 if itemsize == 2 else 8          # sublane tile minimum per dtype

    # ---- chip-aware budgets ------------------------------------------------ #
    vmem_cap = _vmem_capacity_bytes()
    if vmem_cap >= 100 * 1024 * 1024:             # v5e / v6e: 128 MiB VMEM, HBM-bound
        block_budget = 16 * 1024 * 1024
        vmem_limit = 96 * 1024 * 1024
    else:                                         # v7x: 64 MiB VMEM, VALU-bound
        block_budget = 8 * 1024 * 1024
        vmem_limit = 48 * 1024 * 1024

    # ---- class tile: prefer TC == C (contiguous DMA, no mask, no carry) ---- #
    if class_tile is not None:
        TC = int(class_tile)
    elif C * itemsize * min_sub <= block_budget:
        TC = C
    else:
        # Truly huge vocabulary: lane-aligned class chunks (~block_budget/64 per row).
        per_row_bytes = max(128 * itemsize, block_budget // 64)
        TC = max(128, (per_row_bytes // itemsize // 128) * 128)
    nk = pl.cdiv(C, TC)

    # ---- batch tile --------------------------------------------------------- #
    b_round = ((B + min_sub - 1) // min_sub) * min_sub
    if batch_tile is not None:
        TB = int(batch_tile)
    else:
        tb = max(min_sub, block_budget // max(1, TC * itemsize))
        tb = min(tb, 2048, b_round)
        TB = max(min_sub, (tb // min_sub) * min_sub)
        # Guarantee >= 2 batch tiles when possible so v7x's 2nd TensorCore is
        # used via the "parallel" batch axis (neutral on 1-TC chips).
        if pl.cdiv(b_round, TB) < 2 and b_round >= 2 * min_sub:
            TB = max(min_sub, ((b_round // 2 + min_sub - 1) // min_sub) * min_sub)
    ni = pl.cdiv(B, TB)

    scale = float(entropic_scale)
    out_shape = jax.ShapeDtypeStruct((ni * TB, 1), jnp.float32)
    cost = pl.CostEstimate(
        flops=int(3 * B * C),
        transcendentals=int(B * C),
        bytes_accessed=int(B * C * itemsize + ni * TB * 4),
    )

    if nk == 1:
        # Fast path: whole row of classes in one block; no scratch, no phases.
        kernel = functools.partial(_lse_single_block_kernel, entropic_scale=scale)
        lse = pl.pallas_call(
            kernel,
            out_shape=out_shape,
            grid_spec=pltpu.PrefetchScalarGridSpec(
                num_scalar_prefetch=0,
                grid=(ni,),
                in_specs=[pl.BlockSpec((TB, TC), lambda i: (i, 0))],
                out_specs=pl.BlockSpec((TB, 1), lambda i: (i, 0)),
            ),
            compiler_params=pltpu.CompilerParams(
                dimension_semantics=("parallel",),
                vmem_limit_bytes=vmem_limit,
            ),
            cost_estimate=cost,
        )(logits)
    else:
        mask_tail = (C % TC) != 0
        kernel = functools.partial(
            _lse_online_kernel,
            entropic_scale=scale,
            num_classes=C,
            class_tile=TC,
            mask_tail=mask_tail,
        )
        lse = pl.pallas_call(
            kernel,
            out_shape=out_shape,
            grid_spec=pltpu.PrefetchScalarGridSpec(
                num_scalar_prefetch=0,
                grid=(ni, nk),                     # reduction (class) axis last
                in_specs=[pl.BlockSpec((TB, TC), lambda i, k: (i, k))],
                out_specs=pl.BlockSpec((TB, 1), lambda i, k: (i, 0)),
                scratch_shapes=[pltpu.VMEM((TB, 1), jnp.float32)] * 2,  # m, l
            ),
            compiler_params=pltpu.CompilerParams(
                dimension_semantics=("parallel", "arbitrary"),
                vmem_limit_bytes=vmem_limit,
            ),
            cost_estimate=cost,
        )(logits)

    # Target-logit gather: touches only B elements of HBM, so it lives in the
    # wrapper instead of costing ~3 VALU ops/element inside the kernel.
    tgt_idx = targets.astype(jnp.int32)[:, None]
    tgt_logit = jnp.take_along_axis(logits, tgt_idx, axis=-1)[:, 0].astype(jnp.float32)

    # Slice off padded tail batch rows and do the tiny mean reduction in XLA.
    per_example = lse[:B, 0] - scale * tgt_logit
    return jnp.sum(per_example) / jnp.float32(B)


# --------------------------------------------------------------------------- #
# Reference & test
# --------------------------------------------------------------------------- #
def _reference_loss(logits, targets, entropic_scale=1.0):
    x = entropic_scale * logits.astype(jnp.float32)
    logp = jax.nn.log_softmax(x, axis=-1)
    nll = -jnp.take_along_axis(logp, targets[:, None].astype(jnp.int32), axis=-1)
    return jnp.mean(nll)


if __name__ == "__main__":
    key = jax.random.PRNGKey(0)
    k1, k2, k3, k4 = jax.random.split(key, 4)

    # Primary small-shape check (single class-block fast path), scale 1.0 & 2.5.
    B, C = 8, 16
    logits = jax.random.normal(k1, (B, C), dtype=jnp.float32)
    targets = jax.random.randint(k2, (B,), 0, C, dtype=jnp.int32)
    for scale in (1.0, 2.5):
        loss = jax.block_until_ready(softmax_loss_second_part(logits, targets, scale))
        ref = jax.block_until_ready(_reference_loss(logits, targets, scale))
        assert jnp.allclose(loss, ref, rtol=1e-5, atol=1e-5), (scale, loss, ref)

    # Exercise the online (multi class-block) path, including the masked tail
    # class block and a ragged batch tail, by forcing small tiles.
    B2, C2 = 20, 320
    logits2 = jax.random.normal(k3, (B2, C2), dtype=jnp.float32)
    targets2 = jax.random.randint(k4, (B2,), 0, C2, dtype=jnp.int32)
    loss2 = jax.block_until_ready(
        softmax_loss_second_part(logits2, targets2, 1.3, class_tile=128, batch_tile=8))
    ref2 = jax.block_until_ready(_reference_loss(logits2, targets2, 1.3))
    assert jnp.allclose(loss2, ref2, rtol=1e-5, atol=1e-5), (loss2, ref2)

    # TODO(synk): debug=True branch (boolean-mask gather of intra/inter logits
    # produces data-dependent output shapes) has no clean Pallas equivalent.
    # TODO(synk): PyTorch ignore_index semantics (e.g. -100 targets) not modeled.
    print("KERNEL_OK")
</pallas_src>

<mosaic_0001>
module attributes {stable_mosaic.version = 11 : i64} {
  func.func @_lse_single_block_kernel(%arg0: i32, %arg1: memref<8x16xf32, #tpu.memory_space<vmem>>, %arg2: memref<8x1xf32, #tpu.memory_space<vmem>>) attributes {dimension_semantics = [#tpu.dimension_semantics<parallel>], iteration_bounds = array<i64: 1>, scalar_prefetch = 0 : i64, scratch_operands = 0 : i64, tpu.core_type = #tpu.core_type<tc>, window_params = [{transform_indices = @transform_0, window_bounds = array<i64: 8, 16>}, {transform_indices = @transform_1, window_bounds = array<i64: 8, 1>}]} {
    %c0 = arith.constant 0 : index
    %c0_0 = arith.constant 0 : index
    %0 = vector.load %arg1[%c0, %c0_0] : memref<8x16xf32, #tpu.memory_space<vmem>>, vector<8x16xf32>
    %cst = arith.constant dense<0xFF800000> : vector<8xf32>
    %1 = vector.multi_reduction <maximumf>, %0, %cst [1] : vector<8x16xf32> to vector<8xf32>
    %2 = vector.shape_cast %1 : vector<8xf32> to vector<8x1xf32>
    %3 = vector.broadcast %2 : vector<8x1xf32> to vector<8x16xf32>
    %4 = arith.subf %0, %3 : vector<8x16xf32>
    %5 = math.exp %4 : vector<8x16xf32>
    %cst_1 = arith.constant dense<0.000000e+00> : vector<8xf32>
    %6 = vector.multi_reduction <add>, %5, %cst_1 [1] : vector<8x16xf32> to vector<8xf32>
    %7 = vector.shape_cast %6 : vector<8xf32> to vector<8x1xf32>
    %8 = math.log %7 : vector<8x1xf32>
    %9 = arith.addf %2, %8 : vector<8x1xf32>
    %c0_2 = arith.constant 0 : index
    %c0_3 = arith.constant 0 : index
    %10 = vector.load %arg2[%c0_2, %c0_3] : memref<8x1xf32, #tpu.memory_space<vmem>>, vector<8x1xf32>
    tpu.vector_store %arg2[%c0_2, %c0_3], %9 {strides = array<i32>} : memref<8x1xf32, #tpu.memory_space<vmem>>, vector<8x1xf32>,
    return
  }
  func.func @transform_0(%arg0: i32) -> (i32, i32) {
    %c0_i32 = arith.constant 0 : i32
    %c0_i32_0 = arith.constant 0 : i32
    return %arg0, %c0_i32 : i32, i32
  }
  func.func @transform_1(%arg0: i32) -> (i32, i32) {
    %c0_i32 = arith.constant 0 : i32
    %c0_i32_0 = arith.constant 0 : i32
    return %arg0, %c0_i32 : i32, i32
  }
}

</mosaic_0001>

<llo_original>
// kernel: tpu_custom_call.1
$region0: #{tpu_custom_call.1}
  #allocation0 [shape = 'u32[]', space=smem, size = 0x4, offset = 0x4, fixed_abs, tag = 'smem constant byte address 0x4 - core index']
  #allocation1 [shape = 'u32[144,128]{1,0:T(1,128)}', space=vmem, size = 0x12000, scoped, tag = 'internal scratch']
  %s0 = inlined_call_operand.hbm [shape: f32[8,16], index: 0, kind: input, shape index: {}]
  %s1 = inlined_call_operand.vmem [shape: f32[8,1], index: 1, kind: output, shape index: {}]
  %s2 = sld [smem:[#allocation0]]
  $region18: #{tpu_custom_call.1} parent=0
    _
  %s4 = ssub.s32 1, %s2
  %s5 = scalar_select 0, %s4, %s2
  $region1: #{tpu_custom_call.1} parent=0
    #allocation2 [shape = 'u8[4096]{0}', space=vmem, size = 0x1000, scoped, tag = 'input window, operand 0, single buffered']
    #allocation3 [shape = 's32[1]{0}', space=sflag, size = 0x4, scoped, tag = 'scoped memory for tpu_custom_call.1']
    %6 = vsyncpa [#allocation3], 0
    // Predicated region
    $region2: #{tpu_custom_call.1} parent=1 // pred_check
      _
    $region3: #{tpu_custom_call.1} parent=1 // pred_check_branch
      %8 = sbr.rel (0) target = $region5
    $region4: #{tpu_custom_call.1} parent=1 // pred_region
      %s10 = ssub.s32 128, 128
      %11 = vsyncadd [#allocation3], %s10
      %s13 = sshll.u32 [#allocation2], 4
      %s14 = int_to_ptr.vmem [resolvable:$true] %s13
      %16 = dma.hbm_to_vmem [thread:$0]  %s0, 128, %s14, [#allocation3]
    $region5: #{tpu_custom_call.1} parent=1 // pred_fallthru
      _
    // Predicated region
    $region6: #{tpu_custom_call.1} parent=1 // pred_check
      _
    $region7: #{tpu_custom_call.1} parent=1 // pred_check_branch
      %18 = sbr.rel (0) target = $region9
    $region8: #{tpu_custom_call.1} parent=1 // pred_region
      %19 = dma.done [#allocation3], 128
    $region9: #{tpu_custom_call.1} parent=1 // pred_fallthru
      _
    %v20 = vld [vmem:[#allocation2] sm:$0xff]
    %vm21 = vcmask 130048
    %v22 = vsel %vm21, %v20, -inf
    %23 = vmax.xlane.f32.xlu0 %v22
    %v24 = vpop.xlane.xlu0 %23
    %v25 = vsub.f32 %v20, %v24
    %v26 = vmul.f32 %v25, 1.442695
    %v27 = vpow.pop %v26
    %v28 = vsel %vm21, %v27, 0.0
    %29 = vadd.xlane.f32.xlu0 %v28
    %v30 = vpop.xlane.xlu0 %29
    %v31 = vlog2.pop %v30
    %v32 = vmul.f32 %v31, 0.6931472
    %v33 = vadd.f32 %v24, %v32
    %vm34 = vcmask 7168
    %35 = vst.msk [vmem:[%s1] sm:$0xff] %vm34, %v33
    // Predicated region
    $region10: #{tpu_custom_call.1} parent=1 // pred_check
      _
    $region11: #{tpu_custom_call.1} parent=1 // pred_check_branch
      %37 = sbr.rel (0) target = $region13
    $region12: #{tpu_custom_call.1} parent=1 // pred_region
      _
    $region13: #{tpu_custom_call.1} parent=1 // pred_fallthru
      _
    // Predicated region
    $region14: #{tpu_custom_call.1} parent=1 // pred_check
      _
    $region15: #{tpu_custom_call.1} parent=1 // pred_check_branch
      %39 = sbr.rel (0) target = $region17
    $region16: #{tpu_custom_call.1} parent=1 // pred_region
      _
    $region17: #{tpu_custom_call.1} parent=1 // pred_fallthru
      _
    %40 = vsyncpa [#allocation3], 1

</llo_original>
